<compile_context>
chip_gen: v7x
topology: tpu7x:2x2x1
jax: 0.10.0
libtpu: 0.0.40
codegen_flags: <defaults>
</compile_context>

<pallas_src>
import functools

import jax
import jax.numpy as jnp
from jax.experimental import pallas as pl
from jax.experimental.pallas import tpu as pltpu

_LANE = 128


def _round_up(x, m):
    return (x + m - 1) // m * m


# --------------------------------------------------------------------------- #
# Kernel
# --------------------------------------------------------------------------- #
def _qmix_mixer_kernel(x_ref, wcat_ref, bcat_ref, wb22_ref, bb22_ref, out_ref,
                       *, n_agents, state_dim, hidden_dim):
    N, S, H = n_agents, state_dim, hidden_dim

    x = x_ref[...]                                           # (S+N, TB) compute dtype

    # Fused layer-1 hypernets: one MXU matmul, batch on lanes.
    # Row layout of z: [w1 agent0 .. agentN-1 | b1 | w2 | hyper_b2 layer-1], H rows each.
    z = jnp.dot(wcat_ref[...], x, preferred_element_type=jnp.float32)
    z = z + bcat_ref[...]                                    # (C, TB), C = (N+3)*H

    qv = x[S:S + N, :].astype(jnp.float32)                   # (N, TB) agent q-values

    b1 = z[N * H:(N + 1) * H, :]                             # hyper_b1(s)        (H, TB)
    w2 = jnp.abs(z[(N + 1) * H:(N + 2) * H, :])              # |hyper_w2(s)|      (H, TB)
    hb2 = jnp.maximum(z[(N + 2) * H:(N + 3) * H, :], 0.0)    # ReLU of hyper_b2 L1 (H, TB)

    # hidden = ELU( bmm(q (B,1,N), w1 (B,N,H)) + b1 ), unrolled over the N agents.
    h = b1
    for n in range(N):
        h = h + qv[n:n + 1, :] * jnp.abs(z[n * H:(n + 1) * H, :])
    h = jnp.where(h > 0, h, jnp.exp(jnp.minimum(h, 0.0)) - 1.0)   # ELU, alpha=1

    # q_tot = sum_h hidden*w2  +  (hb2 @ Wb2_2 + bb2_2)
    # The degenerate (TB,H)x(H,1) matmul is folded into this single sublane reduce.
    combined = h * w2 + hb2 * wb22_ref[...]                  # (H, TB)
    q_tot = jnp.sum(combined, axis=0, keepdims=True) + bb22_ref[0]   # (1, TB) lane-dense

    out_ref[...] = q_tot.astype(out_ref.dtype)


# --------------------------------------------------------------------------- #
# Parameter fusion (call once, outside the training / inference step)
# --------------------------------------------------------------------------- #
def fuse_qmix_params(params, *, n_agents, compute_dtype=jnp.bfloat16):
    """Fuse the four layer-1 hypernet Linears into one resident weight block.

    Single concatenates (no chained .at[].set()); segments are packed tightly
    (H rows each, no lane padding).  N zero columns are appended so the fused
    matmul can consume the combined [states ; q] input block directly.
    """
    N = n_agents
    wcat_t = jnp.concatenate(
        [params["w1_w"].T, params["b1_w"].T, params["w2_w"].T, params["b2_1_w"].T],
        axis=0)                                                     # (C, S)
    wcat_t = jnp.concatenate(
        [wcat_t, jnp.zeros((wcat_t.shape[0], N), wcat_t.dtype)], axis=1)  # (C, S+N)
    bcat_t = jnp.concatenate(
        [params["w1_b"], params["b1_b"], params["w2_b"], params["b2_1_b"]])[:, None]
    return {
        "wcat_t": wcat_t.astype(compute_dtype),                     # MXU operand
        "bcat_t": bcat_t.astype(jnp.float32),                       # (C, 1)
        "wb22": params["b2_2_w"].astype(jnp.float32),               # (H, 1)
        "bb22": params["b2_2_b"].reshape(1).astype(jnp.float32),    # (1,)  -> SMEM
    }


def _batch_tiling(B, tile_b):
    """>=2 lane tiles when B allows (v7x megacore), near-even split, cap tile_b."""
    tile_b = max(_LANE, tile_b)
    n_tiles = max(1, min(pl.cdiv(B, _LANE), 2))
    n_tiles = max(n_tiles, pl.cdiv(B, tile_b))
    TB = _round_up(pl.cdiv(B, n_tiles), _LANE)
    return n_tiles, TB


# --------------------------------------------------------------------------- #
# Wrapper
# --------------------------------------------------------------------------- #
def qmix_mixer(q_values, states, fused, *, n_agents, state_dim, qmix_hidden_dim,
               tile_b=2048):
    """Pallas forward of QMixMixer (two_hyper_layers=False).

    q_values : (episode, T, n_agents)    states : (episode, T, state_dim)
    fused    : output of fuse_qmix_params(params, ...)
    returns  : (episode, T, 1) float32
    """
    ep = q_values.shape[0]
    N, S, H = n_agents, state_dim, qmix_hidden_dim
    compute_dtype = fused["wcat_t"].dtype

    # Single combined, transposed input stream: batch on the lane axis.
    x = jnp.concatenate(
        [states.reshape(-1, S).T, q_values.reshape(-1, N).T], axis=0
    ).astype(compute_dtype)                                          # (S+N, B)
    B = x.shape[1]

    n_tiles, TB = _batch_tiling(B, tile_b)
    Bp = n_tiles * TB
    if Bp != B:
        x = jnp.pad(x, ((0, 0), (0, Bp - B)))

    kernel = functools.partial(_qmix_mixer_kernel,
                               n_agents=N, state_dim=S, hidden_dim=H)

    out = pl.pallas_call(
        kernel,
        out_shape=jax.ShapeDtypeStruct((1, Bp), jnp.float32),
        grid_spec=pltpu.PrefetchScalarGridSpec(
            num_scalar_prefetch=0,
            grid=(n_tiles,),
            in_specs=[
                pl.BlockSpec((S + N, TB), lambda b: (0, b)),          # [states ; q] tile
                pl.BlockSpec(fused["wcat_t"].shape, lambda b: (0, 0)),  # fused W (resident)
                pl.BlockSpec(fused["bcat_t"].shape, lambda b: (0, 0)),  # fused bias
                pl.BlockSpec(fused["wb22"].shape, lambda b: (0, 0)),    # hyper_b2 L2 weight
                pl.BlockSpec(memory_space=pltpu.MemorySpace.SMEM),      # hyper_b2 L2 bias
            ],
            out_specs=pl.BlockSpec((1, TB), lambda b: (0, b)),        # lane-dense output
        ),
        compiler_params=pltpu.CompilerParams(
            dimension_semantics=("parallel",),        # batch tiles -> megacore on v7x
            vmem_limit_bytes=32 * 1024 * 1024,        # safe ceiling on 64 MiB v7x
        ),
    )(x, fused["wcat_t"], fused["bcat_t"], fused["wb22"], fused["bb22"])

    return out[0, :B].reshape(ep, -1, 1)


# --------------------------------------------------------------------------- #
# Pure-JAX reference and parameter init
# --------------------------------------------------------------------------- #
def qmix_mixer_ref(q_values, states, params, *, n_agents, state_dim, qmix_hidden_dim):
    """Pure-JAX reference mirroring the PyTorch forward."""
    ep = q_values.shape[0]
    N, S, H = n_agents, state_dim, qmix_hidden_dim
    q = q_values.reshape(-1, 1, N).astype(jnp.float32)
    s = states.reshape(-1, S).astype(jnp.float32)

    w1 = jnp.abs(s @ params["w1_w"] + params["w1_b"]).reshape(-1, N, H)
    b1 = (s @ params["b1_w"] + params["b1_b"]).reshape(-1, 1, H)
    hidden = jax.nn.elu(jnp.einsum("bij,bjk->bik", q, w1) + b1)
    w2 = jnp.abs(s @ params["w2_w"] + params["w2_b"]).reshape(-1, H, 1)
    hb2 = jnp.maximum(s @ params["b2_1_w"] + params["b2_1_b"], 0.0)
    b2 = (hb2 @ params["b2_2_w"] + params["b2_2_b"]).reshape(-1, 1, 1)
    q_tot = jnp.einsum("bij,bjk->bik", hidden, w2) + b2
    return q_tot.reshape(ep, -1, 1)


def init_params(key, *, state_dim, n_agents, qmix_hidden_dim):
    """Deterministic parameters; weights stored transposed vs torch (y = x@W + b)."""
    S, N, H = state_dim, n_agents, qmix_hidden_dim
    shapes = {
        "w1_w": (S, N * H), "w1_b": (N * H,),     # hyper_w1
        "b1_w": (S, H),     "b1_b": (H,),         # hyper_b1
        "w2_w": (S, H),     "w2_b": (H,),         # hyper_w2
        "b2_1_w": (S, H),   "b2_1_b": (H,),       # hyper_b2 layer 1
        "b2_2_w": (H, 1),   "b2_2_b": (1,),       # hyper_b2 layer 2
    }
    fan_in = {"w1_w": S, "w1_b": S, "b1_w": S, "b1_b": S, "w2_w": S, "w2_b": S,
              "b2_1_w": S, "b2_1_b": S, "b2_2_w": H, "b2_2_b": H}
    params = {}
    for name, shape in shapes.items():
        key, sub = jax.random.split(key)
        scale = 1.0 / (float(fan_in[name]) ** 0.5)
        params[name] = jax.random.uniform(sub, shape, jnp.float32,
                                          minval=-scale, maxval=scale)
    return params


if __name__ == "__main__":
    n_agents = 4
    state_dim = 32
    qmix_hidden_dim = 32
    episode_num = 2
    T = 8

    key = jax.random.PRNGKey(0)
    key, kq, ks, kp = jax.random.split(key, 4)
    q_values = jax.random.normal(kq, (episode_num, T, n_agents), jnp.float32)
    states = jax.random.normal(ks, (episode_num, T, state_dim), jnp.float32)
    params = init_params(kp, state_dim=state_dim, n_agents=n_agents,
                         qmix_hidden_dim=qmix_hidden_dim)

    ref = qmix_mixer_ref(q_values, states, params, n_agents=n_agents,
                         state_dim=state_dim, qmix_hidden_dim=qmix_hidden_dim)
    dims = dict(n_agents=n_agents, state_dim=state_dim,
                qmix_hidden_dim=qmix_hidden_dim)

    # f32 MXU operands: numerically faithful to the reference.
    fused_f32 = fuse_qmix_params(params, n_agents=n_agents, compute_dtype=jnp.float32)
    out_f32 = jax.block_until_ready(qmix_mixer(q_values, states, fused_f32, **dims))
    assert out_f32.shape == (episode_num, T, 1), out_f32.shape
    assert jnp.allclose(out_f32, ref, atol=1e-4, rtol=1e-4), (out_f32, ref)

    # Default bf16 MXU operands (v6e/v7x recommendation): looser tolerance expected.
    fused_bf16 = fuse_qmix_params(params, n_agents=n_agents)
    out_bf16 = jax.block_until_ready(qmix_mixer(q_values, states, fused_bf16, **dims))
    assert out_bf16.shape == (episode_num, T, 1), out_bf16.shape
    assert jnp.allclose(out_bf16, ref, atol=2.5e-1, rtol=5e-2), (out_bf16, ref)

    print("KERNEL_OK")
</pallas_src>

<mosaic_0001>
module attributes {stable_mosaic.version = 11 : i64} {
  func.func @_qmix_mixer_kernel(%arg0: i32, %arg1: memref<36x128xf32, #tpu.memory_space<vmem>>, %arg2: memref<224x36xf32, #tpu.memory_space<vmem>>, %arg3: memref<224x1xf32, #tpu.memory_space<vmem>>, %arg4: memref<32x1xf32, #tpu.memory_space<vmem>>, %arg5: memref<1xf32, #tpu.memory_space<smem>>, %arg6: memref<1x128xf32, #tpu.memory_space<vmem>>) attributes {dimension_semantics = [#tpu.dimension_semantics<parallel>], iteration_bounds = array<i64: 1>, scalar_prefetch = 0 : i64, scratch_operands = 0 : i64, tpu.core_type = #tpu.core_type<tc>, window_params = [{transform_indices = @transform_0, window_bounds = array<i64: 36, 128>}, {pipeline_mode = #tpu.pipeline_mode<synchronous>, transform_indices = @transform_1, window_bounds = array<i64: 224, 36>}, {pipeline_mode = #tpu.pipeline_mode<synchronous>, transform_indices = @transform_2, window_bounds = array<i64: 224, 1>}, {pipeline_mode = #tpu.pipeline_mode<synchronous>, transform_indices = @transform_3, window_bounds = array<i64: 32, 1>}, {transform_indices = @transform_4, window_bounds = array<i64: 1>}, {transform_indices = @transform_5, window_bounds = array<i64: 1, 128>}]} {
    %c0 = arith.constant 0 : index
    %c0_0 = arith.constant 0 : index
    %0 = vector.load %arg1[%c0, %c0_0] : memref<36x128xf32, #tpu.memory_space<vmem>>, vector<36x128xf32>
    %c0_1 = arith.constant 0 : index
    %c0_2 = arith.constant 0 : index
    %1 = vector.load %arg2[%c0_1, %c0_2] : memref<224x36xf32, #tpu.memory_space<vmem>>, vector<224x36xf32>
    %cst = arith.constant dense<0.000000e+00> : vector<224x128xf32>
    %2 = tpu.matmul %1, %0, %cst {dimension_numbers = #tpu.dot_dimension_numbers<[1], [0], [0], [1], [0, 0, 1, 1], [], []>} : vector<224x36xf32>, vector<36x128xf32>, vector<224x128xf32> -> vector<224x128xf32>
    %c0_3 = arith.constant 0 : index
    %c0_4 = arith.constant 0 : index
    %3 = vector.load %arg3[%c0_3, %c0_4] : memref<224x1xf32, #tpu.memory_space<vmem>>, vector<224x1xf32>
    %4 = vector.broadcast %3 : vector<224x1xf32> to vector<224x128xf32>
    %5 = arith.addf %2, %4 : vector<224x128xf32>
    %6 = vector.extract_strided_slice %0 {offsets = [32, 0], sizes = [4, 128], strides = [1, 1]} : vector<36x128xf32> to vector<4x128xf32>
    %7 = vector.extract_strided_slice %5 {offsets = [128, 0], sizes = [32, 128], strides = [1, 1]} : vector<224x128xf32> to vector<32x128xf32>
    %8 = vector.extract_strided_slice %5 {offsets = [160, 0], sizes = [32, 128], strides = [1, 1]} : vector<224x128xf32> to vector<32x128xf32>
    %9 = math.absf %8 : vector<32x128xf32>
    %10 = vector.extract_strided_slice %5 {offsets = [192, 0], sizes = [32, 128], strides = [1, 1]} : vector<224x128xf32> to vector<32x128xf32>
    %cst_5 = arith.constant 0.000000e+00 : f32
    %11 = vector.broadcast %cst_5 : f32 to vector<32x128xf32>
    %12 = arith.maximumf %10, %11 : vector<32x128xf32>
    %13 = vector.extract_strided_slice %6 {offsets = [0, 0], sizes = [1, 128], strides = [1, 1]} : vector<4x128xf32> to vector<1x128xf32>
    %14 = vector.extract_strided_slice %5 {offsets = [0, 0], sizes = [32, 128], strides = [1, 1]} : vector<224x128xf32> to vector<32x128xf32>
    %15 = math.absf %14 : vector<32x128xf32>
    %16 = vector.broadcast %13 : vector<1x128xf32> to vector<32x128xf32>
    %17 = arith.mulf %16, %15 : vector<32x128xf32>
    %18 = arith.addf %7, %17 : vector<32x128xf32>
    %19 = vector.extract_strided_slice %6 {offsets = [1, 0], sizes = [1, 128], strides = [1, 1]} : vector<4x128xf32> to vector<1x128xf32>
    %20 = vector.extract_strided_slice %5 {offsets = [32, 0], sizes = [32, 128], strides = [1, 1]} : vector<224x128xf32> to vector<32x128xf32>
    %21 = math.absf %20 : vector<32x128xf32>
    %22 = vector.broadcast %19 : vector<1x128xf32> to vector<32x128xf32>
    %23 = arith.mulf %22, %21 : vector<32x128xf32>
    %24 = arith.addf %18, %23 : vector<32x128xf32>
    %25 = vector.extract_strided_slice %6 {offsets = [2, 0], sizes = [1, 128], strides = [1, 1]} : vector<4x128xf32> to vector<1x128xf32>
    %26 = vector.extract_strided_slice %5 {offsets = [64, 0], sizes = [32, 128], strides = [1, 1]} : vector<224x128xf32> to vector<32x128xf32>
    %27 = math.absf %26 : vector<32x128xf32>
    %28 = vector.broadcast %25 : vector<1x128xf32> to vector<32x128xf32>
    %29 = arith.mulf %28, %27 : vector<32x128xf32>
    %30 = arith.addf %24, %29 : vector<32x128xf32>
    %31 = vector.extract_strided_slice %6 {offsets = [3, 0], sizes = [1, 128], strides = [1, 1]} : vector<4x128xf32> to vector<1x128xf32>
    %32 = vector.extract_strided_slice %5 {offsets = [96, 0], sizes = [32, 128], strides = [1, 1]} : vector<224x128xf32> to vector<32x128xf32>
    %33 = math.absf %32 : vector<32x128xf32>
    %34 = vector.broadcast %31 : vector<1x128xf32> to vector<32x128xf32>
    %35 = arith.mulf %34, %33 : vector<32x128xf32>
    %36 = arith.addf %30, %35 : vector<32x128xf32>
    %cst_6 = arith.constant 0.000000e+00 : f32
    %37 = vector.broadcast %cst_6 : f32 to vector<32x128xf32>
    %38 = arith.cmpf ogt, %36, %37 : vector<32x128xf32>
    %cst_7 = arith.constant 0.000000e+00 : f32
    %39 = vector.broadcast %cst_7 : f32 to vector<32x128xf32>
    %40 = arith.minimumf %36, %39 : vector<32x128xf32>
    %41 = math.exp %40 : vector<32x128xf32>
    %cst_8 = arith.constant 1.000000e+00 : f32
    %42 = vector.broadcast %cst_8 : f32 to vector<32x128xf32>
    %43 = arith.subf %41, %42 : vector<32x128xf32>
    %44 = arith.select %38, %36, %43 : vector<32x128xi1>, vector<32x128xf32>
    %45 = arith.mulf %44, %9 : vector<32x128xf32>
    %c0_9 = arith.constant 0 : index
    %c0_10 = arith.constant 0 : index
    %46 = vector.load %arg4[%c0_9, %c0_10] : memref<32x1xf32, #tpu.memory_space<vmem>>, vector<32x1xf32>
    %47 = vector.broadcast %46 : vector<32x1xf32> to vector<32x128xf32>
    %48 = arith.mulf %12, %47 : vector<32x128xf32>
    %49 = arith.addf %45, %48 : vector<32x128xf32>
    %cst_11 = arith.constant dense<0.000000e+00> : vector<128xf32>
    %50 = vector.multi_reduction <add>, %49, %cst_11 [0] : vector<32x128xf32> to vector<128xf32>
    %51 = vector.shape_cast %50 : vector<128xf32> to vector<1x128xf32>
    %c0_12 = arith.constant 0 : index
    %52 = memref.load %arg5[%c0_12] : memref<1xf32, #tpu.memory_space<smem>>
    %53 = vector.broadcast %52 : f32 to vector<1x128xf32>
    %54 = arith.addf %51, %53 : vector<1x128xf32>
    %c0_13 = arith.constant 0 : index
    %c0_14 = arith.constant 0 : index
    %55 = vector.load %arg6[%c0_13, %c0_14] : memref<1x128xf32, #tpu.memory_space<vmem>>, vector<1x128xf32>
    tpu.vector_store %arg6[%c0_13, %c0_14], %54 {strides = array<i32>} : memref<1x128xf32, #tpu.memory_space<vmem>>, vector<1x128xf32>,
    return
  }
  func.func @transform_0(%arg0: i32) -> (i32, i32) {
    %c0_i32 = arith.constant 0 : i32
    %c0_i32_0 = arith.constant 0 : i32
    return %c0_i32, %arg0 : i32, i32
  }
  func.func @transform_1(%arg0: i32) -> (i32, i32) {
    %c0_i32 = arith.constant 0 : i32
    %c0_i32_0 = arith.constant 0 : i32
    %c0_i32_1 = arith.constant 0 : i32
    return %c0_i32, %c0_i32_0 : i32, i32
  }
  func.func @transform_2(%arg0: i32) -> (i32, i32) {
    %c0_i32 = arith.constant 0 : i32
    %c0_i32_0 = arith.constant 0 : i32
    %c0_i32_1 = arith.constant 0 : i32
    return %c0_i32, %c0_i32_0 : i32, i32
  }
  func.func @transform_3(%arg0: i32) -> (i32, i32) {
    %c0_i32 = arith.constant 0 : i32
    %c0_i32_0 = arith.constant 0 : i32
    %c0_i32_1 = arith.constant 0 : i32
    return %c0_i32, %c0_i32_0 : i32, i32
  }
  func.func @transform_4(%arg0: i32) -> i32 {
    %c0_i32 = arith.constant 0 : i32
    %c0_i32_0 = arith.constant 0 : i32
    return %c0_i32 : i32
  }
  func.func @transform_5(%arg0: i32) -> (i32, i32) {
    %c0_i32 = arith.constant 0 : i32
    %c0_i32_0 = arith.constant 0 : i32
    return %c0_i32, %arg0 : i32, i32
  }
}

</mosaic_0001>

<llo_original>
// kernel: tpu_custom_call.1
$region0: #{tpu_custom_call.1}
  #allocation0 [shape = 'u32[]', space=smem, size = 0x4, offset = 0x4, fixed_abs, tag = 'smem constant byte address 0x4 - core index']
  #allocation1 [shape = 'u32[144,128]{1,0:T(1,128)}', space=vmem, size = 0x12000, scoped, tag = 'internal scratch']
  #allocation2 [shape = 'f32[1]{0:T(128)S(6)}', space=smem, size = 0x200, scoped, tag = 'scoped memory for tpu_custom_call.1']
  %s0 = inlined_call_operand.vmem [shape: f32[36,128], index: 0, kind: input, shape index: {}]
  %s1 = inlined_call_operand.vmem [shape: f32[224,36], index: 1, kind: input, shape index: {}]
  %s2 = inlined_call_operand.vmem [shape: f32[224,1], index: 2, kind: input, shape index: {}]
  %s3 = inlined_call_operand.vmem [shape: f32[32,1], index: 3, kind: input, shape index: {}]
  %s4 = inlined_call_operand.<no memory space> [shape: f32[1], index: 4, kind: input, shape index: {}]
  %s5 = inlined_call_operand.hbm [shape: f32[1,128], index: 5, kind: output, shape index: {}]
  %s6 = sld [smem:[#allocation0]]
  $region30: #{tpu_custom_call.1} parent=0
    _
  %s8 = ssub.s32 1, %s6
  %s9 = scalar_select 0, %s8, %s6
  %10 = sst [smem:[#allocation2]] %s4
  $region1: #{tpu_custom_call.1} parent=0
    #allocation3 [shape = 'u8[512]{0}', space=vmem, size = 0x400, scoped, tag = 'output window, operand 0, single buffered']
    #allocation4 [shape = 's32[1]{0}', space=sflag, size = 0x4, scoped, tag = 'scoped memory for tpu_custom_call.1']
    %11 = vsyncpa [#allocation4], 0
    // Predicated region
    $region2: #{tpu_custom_call.1} parent=1 // pred_check
      _
    $region3: #{tpu_custom_call.1} parent=1 // pred_check_branch
      %13 = sbr.rel (0) target = $region5
    $region4: #{tpu_custom_call.1} parent=1 // pred_region
      _
    $region5: #{tpu_custom_call.1} parent=1 // pred_fallthru
      _
    // Predicated region
    $region6: #{tpu_custom_call.1} parent=1 // pred_check
      _
    $region7: #{tpu_custom_call.1} parent=1 // pred_check_branch
      %15 = sbr.rel (0) target = $region9
    $region8: #{tpu_custom_call.1} parent=1 // pred_region
      _
    $region9: #{tpu_custom_call.1} parent=1 // pred_fallthru
      _
    // Predicated region
    $region10: #{tpu_custom_call.1} parent=1 // pred_check
      _
    $region11: #{tpu_custom_call.1} parent=1 // pred_check_branch
      %17 = sbr.rel (0) target = $region13
    $region12: #{tpu_custom_call.1} parent=1 // pred_region
      _
    $region13: #{tpu_custom_call.1} parent=1 // pred_fallthru
      _
    // Predicated region
    $region14: #{tpu_custom_call.1} parent=1 // pred_check
      _
    $region15: #{tpu_custom_call.1} parent=1 // pred_check_branch
      %19 = sbr.rel (0) target = $region17
    $region16: #{tpu_custom_call.1} parent=1 // pred_region
      _
    $region17: #{tpu_custom_call.1} parent=1 // pred_fallthru
      _
    // Predicated region
    $region18: #{tpu_custom_call.1} parent=1 // pred_check
      _
    $region19: #{tpu_custom_call.1} parent=1 // pred_check_branch
      %21 = sbr.rel (0) target = $region21
    $region20: #{tpu_custom_call.1} parent=1 // pred_region
      _
    $region21: #{tpu_custom_call.1} parent=1 // pred_fallthru
      _
    %v22 = vld [vmem:[%s0] sm:$0xff]
    %v23 = vld [vmem:[%s0 + $0x8] sm:$0xff]
    %v24 = vld [vmem:[%s0 + $0x10] sm:$0xff]
    %v25 = vld [vmem:[%s0 + $0x18] sm:$0xff]
    %v26 = vld [vmem:[%s0 + $0x20] sm:$0xf]
    %v27 = vld [vmem:[%s1] sm:$0xff]
    %v28 = vld [vmem:[%s1 + $0x8] sm:$0xff]
    %v29 = vld [vmem:[%s1 + $0x10] sm:$0xff]
    %v30 = vld [vmem:[%s1 + $0x18] sm:$0xff]
    %v31 = vld [vmem:[%s1 + $0x20] sm:$0xff]
    %v32 = vld [vmem:[%s1 + $0x28] sm:$0xff]
    %v33 = vld [vmem:[%s1 + $0x30] sm:$0xff]
    %v34 = vld [vmem:[%s1 + $0x38] sm:$0xff]
    %v35 = vld [vmem:[%s1 + $0x40] sm:$0xff]
    %v36 = vld [vmem:[%s1 + $0x48] sm:$0xff]
    %v37 = vld [vmem:[%s1 + $0x50] sm:$0xff]
    %v38 = vld [vmem:[%s1 + $0x58] sm:$0xff]
    %v39 = vld [vmem:[%s1 + $0x60] sm:$0xff]
    %v40 = vld [vmem:[%s1 + $0x68] sm:$0xff]
    %v41 = vld [vmem:[%s1 + $0x70] sm:$0xff]
    %v42 = vld [vmem:[%s1 + $0x78] sm:$0xff]
    %v43 = vld [vmem:[%s1 + $0x80] sm:$0xff]
    %v44 = vld [vmem:[%s1 + $0x88] sm:$0xff]
    %v45 = vld [vmem:[%s1 + $0x90] sm:$0xff]
    %v46 = vld [vmem:[%s1 + $0x98] sm:$0xff]
    %v47 = vld [vmem:[%s1 + $0xa0] sm:$0xff]
    %v48 = vld [vmem:[%s1 + $0xa8] sm:$0xff]
    %v49 = vld [vmem:[%s1 + $0xb0] sm:$0xff]
    %v50 = vld [vmem:[%s1 + $0xb8] sm:$0xff]
    %v51 = vld [vmem:[%s1 + $0xc0] sm:$0xff]
    %v52 = vld [vmem:[%s1 + $0xc8] sm:$0xff]
    %v53 = vld [vmem:[%s1 + $0xd0] sm:$0xff]
    %v54 = vld [vmem:[%s1 + $0xd8] sm:$0xff]
    %v55 = vld [vmem:[%s2] sm:$0xff]
    %v56 = vld [vmem:[%s2 + $0x8] sm:$0xff]
    %v57 = vld [vmem:[%s2 + $0x10] sm:$0xff]
    %v58 = vld [vmem:[%s2 + $0x18] sm:$0xff]
    %v59 = vld [vmem:[%s2 + $0x20] sm:$0xff]
    %v60 = vld [vmem:[%s2 + $0x28] sm:$0xff]
    %v61 = vld [vmem:[%s2 + $0x30] sm:$0xff]
    %v62 = vld [vmem:[%s2 + $0x38] sm:$0xff]
    %v63 = vld [vmem:[%s2 + $0x40] sm:$0xff]
    %v64 = vld [vmem:[%s2 + $0x48] sm:$0xff]
    %v65 = vld [vmem:[%s2 + $0x50] sm:$0xff]
    %v66 = vld [vmem:[%s2 + $0x58] sm:$0xff]
    %v67 = vld [vmem:[%s2 + $0x60] sm:$0xff]
    %v68 = vld [vmem:[%s2 + $0x68] sm:$0xff]
    %v69 = vld [vmem:[%s2 + $0x70] sm:$0xff]
    %v70 = vld [vmem:[%s2 + $0x78] sm:$0xff]
    %v71 = vld [vmem:[%s2 + $0x80] sm:$0xff]
    %v72 = vld [vmem:[%s2 + $0x88] sm:$0xff]
    %v73 = vld [vmem:[%s2 + $0x90] sm:$0xff]
    %v74 = vld [vmem:[%s2 + $0x98] sm:$0xff]
    %v75 = vld [vmem:[%s2 + $0xa0] sm:$0xff]
    %v76 = vld [vmem:[%s2 + $0xa8] sm:$0xff]
    %v77 = vld [vmem:[%s2 + $0xb0] sm:$0xff]
    %v78 = vld [vmem:[%s2 + $0xb8] sm:$0xff]
    %v79 = vld [vmem:[%s2 + $0xc0] sm:$0xff]
    %v80 = vld [vmem:[%s2 + $0xc8] sm:$0xff]
    %v81 = vld [vmem:[%s2 + $0xd0] sm:$0xff]
    %v82 = vld [vmem:[%s2 + $0xd8] sm:$0xff]
    %84 = vset.pattern.permute.xlu0 0
    %85 = vperm.xlu0 %84, %v55
    %v86 = vpop.permute.xlu0 %85
    %89 = vset.pattern.permute.xlu0 0
    %90 = vperm.xlu0 %89, %v56
    %v91 = vpop.permute.xlu0 %90
    %94 = vset.pattern.permute.xlu0 0
    %95 = vperm.xlu0 %94, %v57
    %v96 = vpop.permute.xlu0 %95
    %99 = vset.pattern.permute.xlu0 0
    %100 = vperm.xlu0 %99, %v58
    %v101 = vpop.permute.xlu0 %100
    %104 = vset.pattern.permute.xlu0 0
    %105 = vperm.xlu0 %104, %v59
    %v106 = vpop.permute.xlu0 %105
    %109 = vset.pattern.permute.xlu0 0
    %110 = vperm.xlu0 %109, %v60
    %v111 = vpop.permute.xlu0 %110
    %114 = vset.pattern.permute.xlu0 0
    %115 = vperm.xlu0 %114, %v61
    %v116 = vpop.permute.xlu0 %115
    %119 = vset.pattern.permute.xlu0 0
    %120 = vperm.xlu0 %119, %v62
    %v121 = vpop.permute.xlu0 %120
    %124 = vset.pattern.permute.xlu0 0
    %125 = vperm.xlu0 %124, %v63
    %v126 = vpop.permute.xlu0 %125
    %129 = vset.pattern.permute.xlu0 0
    %130 = vperm.xlu0 %129, %v64
    %v131 = vpop.permute.xlu0 %130
    %134 = vset.pattern.permute.xlu0 0
    %135 = vperm.xlu0 %134, %v65
    %v136 = vpop.permute.xlu0 %135
    %139 = vset.pattern.permute.xlu0 0
    %140 = vperm.xlu0 %139, %v66
    %v141 = vpop.permute.xlu0 %140
    %144 = vset.pattern.permute.xlu0 0
    %145 = vperm.xlu0 %144, %v67
    %v146 = vpop.permute.xlu0 %145
    %149 = vset.pattern.permute.xlu0 0
    %150 = vperm.xlu0 %149, %v68
    %v151 = vpop.permute.xlu0 %150
    %154 = vset.pattern.permute.xlu0 0
    %155 = vperm.xlu0 %154, %v69
    %v156 = vpop.permute.xlu0 %155
    %159 = vset.pattern.permute.xlu0 0
    %160 = vperm.xlu0 %159, %v70
    %v161 = vpop.permute.xlu0 %160
    %164 = vset.pattern.permute.xlu0 0
    %165 = vperm.xlu0 %164, %v71
    %v166 = vpop.permute.xlu0 %165
    %169 = vset.pattern.permute.xlu0 0
    %170 = vperm.xlu0 %169, %v72
    %v171 = vpop.permute.xlu0 %170
    %174 = vset.pattern.permute.xlu0 0
    %175 = vperm.xlu0 %174, %v73
    %v176 = vpop.permute.xlu0 %175
    %179 = vset.pattern.permute.xlu0 0
    %180 = vperm.xlu0 %179, %v74
    %v181 = vpop.permute.xlu0 %180
    %184 = vset.pattern.permute.xlu0 0
    %185 = vperm.xlu0 %184, %v75
    %v186 = vpop.permute.xlu0 %185
    %189 = vset.pattern.permute.xlu0 0
    %190 = vperm.xlu0 %189, %v76
    %v191 = vpop.permute.xlu0 %190
    %194 = vset.pattern.permute.xlu0 0
    %195 = vperm.xlu0 %194, %v77
    %v196 = vpop.permute.xlu0 %195
    %199 = vset.pattern.permute.xlu0 0
    %200 = vperm.xlu0 %199, %v78
    %v201 = vpop.permute.xlu0 %200
    %204 = vset.pattern.permute.xlu0 0
    %205 = vperm.xlu0 %204, %v79
    %v206 = vpop.permute.xlu0 %205
    %209 = vset.pattern.permute.xlu0 0
    %210 = vperm.xlu0 %209, %v80
    %v211 = vpop.permute.xlu0 %210
    %214 = vset.pattern.permute.xlu0 0
    %215 = vperm.xlu0 %214, %v81
    %v216 = vpop.permute.xlu0 %215
    %219 = vset.pattern.permute.xlu0 0
    %220 = vperm.xlu0 %219, %v82
    %v221 = vpop.permute.xlu0 %220
    %vm223 = vcmask 293888
    %v225 = vsel %vm223, %v27, 0
    %v228 = vsel %vm223, %v28, 0
    %v231 = vsel %vm223, %v29, 0
    %v234 = vsel %vm223, %v30, 0
    %v237 = vsel %vm223, %v31, 0
    %v240 = vsel %vm223, %v32, 0
    %v243 = vsel %vm223, %v33, 0
    %v246 = vsel %vm223, %v34, 0
    %v249 = vsel %vm223, %v35, 0
    %v252 = vsel %vm223, %v36, 0
    %v255 = vsel %vm223, %v37, 0
    %v258 = vsel %vm223, %v38, 0
    %v261 = vsel %vm223, %v39, 0
    %v264 = vsel %vm223, %v40, 0
    %v267 = vsel %vm223, %v41, 0
    %v270 = vsel %vm223, %v42, 0
    %v273 = vsel %vm223, %v43, 0
    %v276 = vsel %vm223, %v44, 0
    %v279 = vsel %vm223, %v45, 0
    %v282 = vsel %vm223, %v46, 0
    %v285 = vsel %vm223, %v47, 0
    %v288 = vsel %vm223, %v48, 0
    %v291 = vsel %vm223, %v49, 0
    %v294 = vsel %vm223, %v50, 0
    %v297 = vsel %vm223, %v51, 0
    %v300 = vsel %vm223, %v52, 0
    %v303 = vsel %vm223, %v53, 0
    %v306 = vsel %vm223, %v54, 0
    %vm308 = vcmask 1043456
    %v310 = vsel %vm308, %v26, 0
    %312 = vmatprep.subr.mxu0 0.0
    %313 = vmatpush1.msra.mxu0 %v22
    %314 = vmatprep.subr.mxu0 0.0
    %315 = vmatpush1.msra.mxu0 %v23
    %316 = vmatprep.subr.mxu0 0.0
    %317 = vmatpush1.msra.mxu0 %v24
    %318 = vmatprep.subr.mxu0 0.0
    %319 = vmatpush1.msra.mxu0 %v25
    %320 = vmatprep.subr.mxu0 0.0
    %321 = vmatpush1.msra.mxu0 %v310
    %322 = vmatprep.subr.mxu0 0.0
    %323 = vmatpush1.msra.mxu0 0.0
    %324 = vmatprep.subr.mxu0 0.0
    %325 = vmatpush1.msra.mxu0 0.0
    %326 = vmatprep.subr.mxu0 0.0
    %327 = vmatpush1.msra.mxu0 0.0
    %328 = vmatprep.subr.mxu0 0.0
    %329 = vmatpush1.msra.mxu0 0.0
    %330 = vmatprep.subr.mxu0 0.0
    %331 = vmatpush1.msra.mxu0 0.0
    %332 = vmatprep.subr.mxu0 0.0
    %333 = vmatpush1.msra.mxu0 0.0
    %334 = vmatprep.subr.mxu0 0.0
    %335 = vmatpush1.msra.mxu0 0.0
    %336 = vmatprep.subr.mxu0 0.0
    %337 = vmatpush1.msra.mxu0 0.0
    %338 = vmatprep.subr.mxu0 0.0
    %339 = vmatpush1.msra.mxu0 0.0
    %340 = vmatprep.subr.mxu0 0.0
    %341 = vmatpush1.msra.mxu0 0.0
    %342 = vmatprep.subr.mxu0 0.0
    %343 = vmatpush1.msra.mxu0 0.0
    %344 = vmatprep.subr.mxu0 0.0
    %345 = vmatpush1.msra.mxu0 0.0
    %346 = vmatprep.subr.mxu0 0.0
    %347 = vmatpush1.msra.mxu0 0.0
    %348 = vmatprep.subr.mxu0 0.0
    %349 = vmatpush1.msra.mxu0 0.0
    %350 = vmatprep.subr.mxu0 0.0
    %351 = vmatpush1.msra.mxu0 0.0
    %352 = vmatprep.subr.mxu0 0.0
    %353 = vmatpush1.msra.mxu0 0.0
    %354 = vmatprep.subr.mxu0 0.0
    %355 = vmatpush1.msra.mxu0 0.0
    %356 = vmatprep.subr.mxu0 0.0
    %357 = vmatpush1.msra.mxu0 0.0
    %358 = vmatprep.subr.mxu0 0.0
    %359 = vmatpush1.msra.mxu0 0.0
    %360 = vmatprep.subr.mxu0 0.0
    %361 = vmatpush1.msra.mxu0 0.0
    %362 = vmatprep.subr.mxu0 0.0
    %363 = vmatpush1.msra.mxu0 0.0
    %364 = vmatprep.subr.mxu0 0.0
    %365 = vmatpush1.msra.mxu0 0.0
    %366 = vmatprep.subr.mxu0 0.0
    %367 = vmatpush1.msra.mxu0 0.0
    %368 = vmatprep.subr.mxu0 0.0
    %369 = vmatpush1.msra.mxu0 0.0
    %370 = vmatprep.subr.mxu0 0.0
    %371 = vmatpush1.msra.mxu0 0.0
    %372 = vmatprep.subr.mxu0 0.0
    %373 = vmatpush1.msra.mxu0 0.0
    %374 = vmatprep.subr.mxu0 0.0
    %375 = vmatpush1.msra.mxu0 0.0
    %376 = vmatprep.mubr.f32.mxu0 0.0
    %377 = vmatmul.mubr.f32.gmra.mrb[0].mxu0 %v225
    %v378 = vpop.f32.mrb[0].mxu0
    %v379 = vadd.f32 %v86, %v378
    %v380 = vpop.f32.mrb[0].mxu0
    %381 = vmatprep.mubr.f32.mxu0 0.0
    %382 = vmatmul.mubr.f32.gmra.mrb[0].mxu0 %v228
    %v383 = vpop.f32.mrb[0].mxu0
    %v384 = vadd.f32 %v91, %v383
    %v385 = vpop.f32.mrb[0].mxu0
    %386 = vmatprep.mubr.f32.mxu0 0.0
    %387 = vmatmul.mubr.f32.gmra.mrb[0].mxu0 %v231
    %v388 = vpop.f32.mrb[0].mxu0
    %v389 = vadd.f32 %v96, %v388
    %v390 = vpop.f32.mrb[0].mxu0
    %391 = vmatprep.mubr.f32.mxu0 0.0
    %392 = vmatmul.mubr.f32.gmra.mrb[0].mxu0 %v234
    %v393 = vpop.f32.mrb[0].mxu0
    %v394 = vadd.f32 %v101, %v393
    %v395 = vpop.f32.mrb[0].mxu0
    %396 = vmatprep.mubr.f32.mxu0 0.0
    %397 = vmatmul.mubr.f32.gmra.mrb[0].mxu0 %v237
    %v398 = vpop.f32.mrb[0].mxu0
    %v399 = vadd.f32 %v106, %v398
    %v400 = vpop.f32.mrb[0].mxu0
    %401 = vmatprep.mubr.f32.mxu0 0.0
    %402 = vmatmul.mubr.f32.gmra.mrb[0].mxu0 %v240
    %v403 = vpop.f32.mrb[0].mxu0
    %v404 = vadd.f32 %v111, %v403
    %v405 = vpop.f32.mrb[0].mxu0
    %406 = vmatprep.mubr.f32.mxu0 0.0
    %407 = vmatmul.mubr.f32.gmra.mrb[0].mxu0 %v243
    %v408 = vpop.f32.mrb[0].mxu0
    %v409 = vadd.f32 %v116, %v408
    %v410 = vpop.f32.mrb[0].mxu0
    %411 = vmatprep.mubr.f32.mxu0 0.0
    %412 = vmatmul.mubr.f32.gmra.mrb[0].mxu0 %v246
    %v413 = vpop.f32.mrb[0].mxu0
    %v414 = vadd.f32 %v121, %v413
    %v415 = vpop.f32.mrb[0].mxu0
    %416 = vmatprep.mubr.f32.mxu0 0.0
    %417 = vmatmul.mubr.f32.gmra.mrb[0].mxu0 %v249
    %v418 = vpop.f32.mrb[0].mxu0
    %v419 = vadd.f32 %v126, %v418
    %v420 = vpop.f32.mrb[0].mxu0
    %421 = vmatprep.mubr.f32.mxu0 0.0
    %422 = vmatmul.mubr.f32.gmra.mrb[0].mxu0 %v252
    %v423 = vpop.f32.mrb[0].mxu0
    %v424 = vadd.f32 %v131, %v423
    %v425 = vpop.f32.mrb[0].mxu0
    %426 = vmatprep.mubr.f32.mxu0 0.0
    %427 = vmatmul.mubr.f32.gmra.mrb[0].mxu0 %v255
    %v428 = vpop.f32.mrb[0].mxu0
    %v429 = vadd.f32 %v136, %v428
    %v430 = vpop.f32.mrb[0].mxu0
    %431 = vmatprep.mubr.f32.mxu0 0.0
    %432 = vmatmul.mubr.f32.gmra.mrb[0].mxu0 %v258
    %v433 = vpop.f32.mrb[0].mxu0
    %v434 = vadd.f32 %v141, %v433
    %v435 = vpop.f32.mrb[0].mxu0
    %436 = vmatprep.mubr.f32.mxu0 0.0
    %437 = vmatmul.mubr.f32.gmra.mrb[0].mxu0 %v261
    %v438 = vpop.f32.mrb[0].mxu0
    %v439 = vadd.f32 %v146, %v438
    %v440 = vpop.f32.mrb[0].mxu0
    %441 = vmatprep.mubr.f32.mxu0 0.0
    %442 = vmatmul.mubr.f32.gmra.mrb[0].mxu0 %v264
    %v443 = vpop.f32.mrb[0].mxu0
    %v444 = vadd.f32 %v151, %v443
    %v445 = vpop.f32.mrb[0].mxu0
    %446 = vmatprep.mubr.f32.mxu0 0.0
    %447 = vmatmul.mubr.f32.gmra.mrb[0].mxu0 %v267
    %v448 = vpop.f32.mrb[0].mxu0
    %v449 = vadd.f32 %v156, %v448
    %v450 = vpop.f32.mrb[0].mxu0
    %451 = vmatprep.mubr.f32.mxu0 0.0
    %452 = vmatmul.mubr.f32.gmra.mrb[0].mxu0 %v270
    %v453 = vpop.f32.mrb[0].mxu0
    %v454 = vadd.f32 %v161, %v453
    %v455 = vpop.f32.mrb[0].mxu0
    %456 = vmatprep.mubr.f32.mxu0 0.0
    %457 = vmatmul.mubr.f32.gmra.mrb[0].mxu0 %v273
    %v458 = vpop.f32.mrb[0].mxu0
    %v459 = vadd.f32 %v166, %v458
    %v460 = vpop.f32.mrb[0].mxu0
    %461 = vmatprep.mubr.f32.mxu0 0.0
    %462 = vmatmul.mubr.f32.gmra.mrb[0].mxu0 %v276
    %v463 = vpop.f32.mrb[0].mxu0
    %v464 = vadd.f32 %v171, %v463
    %v465 = vpop.f32.mrb[0].mxu0
    %466 = vmatprep.mubr.f32.mxu0 0.0
    %467 = vmatmul.mubr.f32.gmra.mrb[0].mxu0 %v279
    %v468 = vpop.f32.mrb[0].mxu0
    %v469 = vadd.f32 %v176, %v468
    %v470 = vpop.f32.mrb[0].mxu0
    %471 = vmatprep.mubr.f32.mxu0 0.0
    %472 = vmatmul.mubr.f32.gmra.mrb[0].mxu0 %v282
    %v473 = vpop.f32.mrb[0].mxu0
    %v474 = vadd.f32 %v181, %v473
    %v475 = vpop.f32.mrb[0].mxu0
    %476 = vmatprep.mubr.f32.mxu0 0.0
    %477 = vmatmul.mubr.f32.gmra.mrb[0].mxu0 %v285
    %v478 = vpop.f32.mrb[0].mxu0
    %v479 = vadd.f32 %v186, %v478
    %v480 = vpop.f32.mrb[0].mxu0
    %481 = vmatprep.mubr.f32.mxu0 0.0
    %482 = vmatmul.mubr.f32.gmra.mrb[0].mxu0 %v288
    %v483 = vpop.f32.mrb[0].mxu0
    %v484 = vadd.f32 %v191, %v483
    %v485 = vpop.f32.mrb[0].mxu0
    %486 = vmatprep.mubr.f32.mxu0 0.0
    %487 = vmatmul.mubr.f32.gmra.mrb[0].mxu0 %v291
    %v488 = vpop.f32.mrb[0].mxu0
    %v489 = vadd.f32 %v196, %v488
    %v490 = vpop.f32.mrb[0].mxu0
    %491 = vmatprep.mubr.f32.mxu0 0.0
    %492 = vmatmul.mubr.f32.gmra.mrb[0].mxu0 %v294
    %v493 = vpop.f32.mrb[0].mxu0
    %v494 = vadd.f32 %v201, %v493
    %v495 = vpop.f32.mrb[0].mxu0
    %496 = vmatprep.mubr.f32.mxu0 0.0
    %497 = vmatmul.mubr.f32.gmra.mrb[0].mxu0 %v297
    %v498 = vpop.f32.mrb[0].mxu0
    %v499 = vadd.f32 %v206, %v498
    %v500 = vpop.f32.mrb[0].mxu0
    %501 = vmatprep.mubr.f32.mxu0 0.0
    %502 = vmatmul.mubr.f32.gmra.mrb[0].mxu0 %v300
    %v503 = vpop.f32.mrb[0].mxu0
    %v504 = vadd.f32 %v211, %v503
    %v505 = vpop.f32.mrb[0].mxu0
    %506 = vmatprep.mubr.f32.mxu0 0.0
    %507 = vmatmul.mubr.f32.gmra.mrb[0].mxu0 %v303
    %v508 = vpop.f32.mrb[0].mxu0
    %v509 = vadd.f32 %v216, %v508
    %v510 = vpop.f32.mrb[0].mxu0
    %511 = vmatprep.mubr.f32.mxu0 0.0
    %512 = vmatmul.mubr.f32.gmra.mrb[0].mxu0 %v306
    %v513 = vpop.f32.mrb[0].mxu0
    %v514 = vadd.f32 %v221, %v513
    %v515 = vpop.f32.mrb[0].mxu0
    %516 = vdwg.mxu0
    %v517 = vand.u32 2147483647, %v479
    %v518 = vand.u32 2147483647, %v484
    %v519 = vand.u32 2147483647, %v489
    %v520 = vand.u32 2147483647, %v494
    %v521 = vmax.f32 %v499, 0.0
    %v522 = vmax.f32 %v504, 0.0
    %v523 = vmax.f32 %v509, 0.0
    %v524 = vmax.f32 %v514, 0.0
    %v525 = vand.u32 2147483647, %v379
    %v526 = vand.u32 2147483647, %v384
    %v527 = vand.u32 2147483647, %v389
    %v528 = vand.u32 2147483647, %v394
    %v529 = vlaneseq
    %v530 = vshrl.u32 %v529, 7
    %v531 = vsub.s32 0, %v530
    %v532 = vrot.slane %v26, %v531
    %v533 = vmul.f32 %v532, %v525
    %v534 = vmul.f32 %v532, %v526
    %v535 = vmul.f32 %v532, %v527
    %v536 = vmul.f32 %v532, %v528
    %v537 = vadd.f32 %v459, %v533
    %v538 = vadd.f32 %v464, %v534
    %v539 = vadd.f32 %v469, %v535
    %v540 = vadd.f32 %v474, %v536
    %v541 = vand.u32 2147483647, %v399
    %v542 = vand.u32 2147483647, %v404
    %v543 = vand.u32 2147483647, %v409
    %v544 = vand.u32 2147483647, %v414
    %v545 = vlaneseq
    %v546 = vshrl.u32 %v545, 7
    %v547 = vsub.s32 1, %v546
    %v548 = vrot.slane %v26, %v547
    %v549 = vmul.f32 %v548, %v541
    %v550 = vmul.f32 %v548, %v542
    %v551 = vmul.f32 %v548, %v543
    %v552 = vmul.f32 %v548, %v544
    %v553 = vadd.f32 %v537, %v549
    %v554 = vadd.f32 %v538, %v550
    %v555 = vadd.f32 %v539, %v551
    %v556 = vadd.f32 %v540, %v552
    %v557 = vand.u32 2147483647, %v419
    %v558 = vand.u32 2147483647, %v424
    %v559 = vand.u32 2147483647, %v429
    %v560 = vand.u32 2147483647, %v434
    %v561 = vlaneseq
    %v562 = vshrl.u32 %v561, 7
    %v563 = vsub.s32 2, %v562
    %v564 = vrot.slane %v26, %v563
    %v565 = vmul.f32 %v564, %v557
    %v566 = vmul.f32 %v564, %v558
    %v567 = vmul.f32 %v564, %v559
    %v568 = vmul.f32 %v564, %v560
    %v569 = vadd.f32 %v553, %v565
    %v570 = vadd.f32 %v554, %v566
    %v571 = vadd.f32 %v555, %v567
    %v572 = vadd.f32 %v556, %v568
    %v573 = vand.u32 2147483647, %v439
    %v574 = vand.u32 2147483647, %v444
    %v575 = vand.u32 2147483647, %v449
    %v576 = vand.u32 2147483647, %v454
    %v577 = vlaneseq
    %v578 = vshrl.u32 %v577, 7
    %v579 = vsub.s32 3, %v578
    %v580 = vrot.slane %v26, %v579
    %v581 = vmul.f32 %v580, %v573
    %v582 = vmul.f32 %v580, %v574
    %v583 = vmul.f32 %v580, %v575
    %v584 = vmul.f32 %v580, %v576
    %v585 = vadd.f32 %v569, %v581
    %v586 = vadd.f32 %v570, %v582
    %v587 = vadd.f32 %v571, %v583
    %v588 = vadd.f32 %v572, %v584
    %vm589 = vcmp.gt.f32.partialorder %v585, 0.0
    %vm590 = vcmp.gt.f32.partialorder %v586, 0.0
    %vm591 = vcmp.gt.f32.partialorder %v587, 0.0
    %vm592 = vcmp.gt.f32.partialorder %v588, 0.0
    %v593 = vmin.f32 %v585, 0.0
    %v594 = vmin.f32 %v586, 0.0
    %v595 = vmin.f32 %v587, 0.0
    %v596 = vmin.f32 %v588, 0.0
    %v597 = vmul.f32 %v593, 1.442695
    %v598 = vpow.pop %v597
    %v599 = vmul.f32 %v594, 1.442695
    %v600 = vpow.pop %v599
    %v601 = vmul.f32 %v595, 1.442695
    %v602 = vpow.pop %v601
    %v603 = vmul.f32 %v596, 1.442695
    %v604 = vpow.pop %v603
    %v605 = vsub.f32 %v598, 1.0
    %v606 = vsub.f32 %v600, 1.0
    %v607 = vsub.f32 %v602, 1.0
    %v608 = vsub.f32 %v604, 1.0
    %v609 = vsel %vm589, %v585, %v605
    %v610 = vsel %vm590, %v586, %v606
    %v611 = vsel %vm591, %v587, %v607
    %v612 = vsel %vm592, %v588, %v608
    %v613 = vmul.f32 %v609, %v517
    %v614 = vmul.f32 %v610, %v518
    %v615 = vmul.f32 %v611, %v519
    %v616 = vmul.f32 %v612, %v520
    %v617 = vld [vmem:[%s3] sm:$0xff]
    %v618 = vld [vmem:[%s3 + $0x8] sm:$0xff]
    %v619 = vld [vmem:[%s3 + $0x10] sm:$0xff]
    %v620 = vld [vmem:[%s3 + $0x18] sm:$0xff]
    %622 = vset.pattern.permute.xlu0 0
    %623 = vperm.xlu0 %622, %v617
    %v624 = vpop.permute.xlu0 %623
    %627 = vset.pattern.permute.xlu0 0
    %628 = vperm.xlu0 %627, %v618
    %v629 = vpop.permute.xlu0 %628
    %632 = vset.pattern.permute.xlu0 0
    %633 = vperm.xlu0 %632, %v619
    %v634 = vpop.permute.xlu0 %633
    %637 = vset.pattern.permute.xlu0 0
    %638 = vperm.xlu0 %637, %v620
    %v639 = vpop.permute.xlu0 %638
    %v641 = vmul.f32 %v521, %v624
    %v642 = vmul.f32 %v522, %v629
    %v643 = vmul.f32 %v523, %v634
    %v644 = vmul.f32 %v524, %v639
    %v645 = vadd.f32 %v613, %v641
    %v646 = vadd.f32 %v614, %v642
    %v647 = vadd.f32 %v615, %v643
    %v648 = vadd.f32 %v616, %v644
    %v649 = vadd.f32 %v645, %v646
    %v650 = vadd.f32 %v649, %v647
    %v651 = vadd.f32 %v650, %v648
    %v652 = vrot.slane %v651, 4
    %v653 = vadd.f32 %v651, %v652
    %v654 = vrot.slane %v653, 2
    %v655 = vadd.f32 %v653, %v654
    %v656 = vrot.slane %v655, 1
    %v657 = vadd.f32 %v655, %v656
    %s658 = sld [smem:[#allocation2]]
    %v659 = vstv %s658
    %v660 = vadd.f32 %v657, %v659
    %661 = vst [vmem:[#allocation3] sm:$0x1] %v660
    // Predicated region
    $region22: #{tpu_custom_call.1} parent=1 // pred_check
      _
    $region23: #{tpu_custom_call.1} parent=1 // pred_check_branch
      %663 = sbr.rel (0) target = $region25
    $region24: #{tpu_custom_call.1} parent=1 // pred_region
      %s665 = ssub.s32 16, 16
      %666 = vsyncadd [#allocation4], %s665
      %s668 = sshll.u32 [#allocation3], 4
      %s669 = int_to_ptr.vmem [resolvable:$true] %s668
      %671 = dma.vmem_to_hbm [thread:$0]  %s669, 16, %s5, [#allocation4]
    $region25: #{tpu_custom_call.1} parent=1 // pred_fallthru
      _
    // Predicated region
    $region26: #{tpu_custom_call.1} parent=1 // pred_check
      _
    $region27: #{tpu_custom_call.1} parent=1 // pred_check_branch
      %673 = sbr.rel (0) target = $region29
    $region28: #{tpu_custom_call.1} parent=1 // pred_region
      %674 = dma.done [#allocation4], 16
    $region29: #{tpu_custom_call.1} parent=1 // pred_fallthru
      _
    %675 = vsyncpa [#allocation4], 1

</llo_original>
